<compile_context>
chip_gen: v6e
topology: v6e:2x2x1
jax: 0.10.0
libtpu: 0.0.40
codegen_flags: <defaults>
</compile_context>

<pallas_src>
import jax
import jax.numpy as jnp
from jax.experimental import pallas as pl
from jax.experimental.pallas import tpu as pltpu


def _peak_constraint_kernel(x_ref, peak_ref, o_ref):
    """Elementwise peak-constraint activation.

    x_ref:    VMEM ref, (block_rows, lane_width), input dtype
    peak_ref: SMEM ref, (1,) float32  -- the scalar `peak`
    o_ref:    VMEM ref, (block_rows, lane_width), input dtype
    """
    x = x_ref[...]
    peak = peak_ref[0].astype(x.dtype)
    neg_peak = -peak
    # Exact fold of: Threshold(-peak,-peak); negate; Threshold(-peak,-peak); negate.
    low = jnp.where(x > neg_peak, x, neg_peak)      # NaN -> -peak, like nn.Threshold
    o_ref[...] = jnp.where(low < peak, low, peak)


def _round_up(a, b):
    return ((a + b - 1) // b) * b


def peak_constraint(x, peak, *, lane_width=1024, max_block_rows=256):
    """Apply PeakConstraint(peak) to a tensor x (any shape) via a Pallas kernel."""
    orig_shape = x.shape
    dtype = x.dtype
    total = x.size

    # Sublane multiple depends on packing (f32: 8, bf16: 16, int8/fp8: 32).
    itemsize = jnp.dtype(dtype).itemsize
    sublane = max(8, 32 // max(1, itemsize))

    # Lane-dense flattening: view as (rows, lane_width), lane_width % 128 == 0.
    rows = -(-total // lane_width)                       # ceil
    block_rows = min(_round_up(max_block_rows, sublane),
                     _round_up(rows, sublane))
    rows_padded = _round_up(rows, block_rows)
    padded_total = rows_padded * lane_width

    flat = x.reshape(-1)
    if padded_total != total:
        flat = jnp.pad(flat, (0, padded_total - total))
    x2d = flat.reshape(rows_padded, lane_width)

    peak_arr = jnp.asarray([peak], dtype=jnp.float32)

    grid = (rows_padded // block_rows,)

    out2d = pl.pallas_call(
        _peak_constraint_kernel,
        out_shape=jax.ShapeDtypeStruct((rows_padded, lane_width), dtype),
        grid=grid,
        in_specs=[
            pl.BlockSpec((block_rows, lane_width), lambda i: (i, 0)),
            pl.BlockSpec(memory_space=pltpu.SMEM),
        ],
        out_specs=pl.BlockSpec((block_rows, lane_width), lambda i: (i, 0)),
        input_output_aliases={0: 0},
        compiler_params=pltpu.CompilerParams(
            dimension_semantics=("parallel",),
        ),
    )(x2d, peak_arr)

    return out2d.reshape(-1)[:total].reshape(orig_shape)


def _reference(x, peak):
    """Plain-JAX replica of the exact PyTorch forward (4-op chain)."""
    neg_peak = -peak
    r = jnp.where(x > neg_peak, x, neg_peak)
    r = -r
    r = jnp.where(r > neg_peak, r, neg_peak)
    r = -r
    return r


if __name__ == "__main__":
    # Deterministic parameter from __init__: peak value.
    PEAK = 1.0

    key = jax.random.PRNGKey(0)

    # Aligned case (matches the module's typical NCHW input).
    x = jax.random.normal(key, (2, 4, 16, 16), dtype=jnp.float32) * 3.0
    out = jax.block_until_ready(peak_constraint(x, PEAK))
    ref = _reference(x, PEAK)
    assert out.shape == x.shape and out.dtype == x.dtype
    assert jnp.allclose(out, ref, atol=1e-6), "mismatch vs reference (aligned)"

    # Non-lane-aligned case (e.g. 7x7 feature maps) exercises the padding path.
    key2 = jax.random.PRNGKey(0)
    x_odd = jax.random.normal(key2, (2, 3, 7, 7), dtype=jnp.float32) * 3.0
    out_odd = jax.block_until_ready(peak_constraint(x_odd, PEAK))
    ref_odd = _reference(x_odd, PEAK)
    assert out_odd.shape == x_odd.shape and out_odd.dtype == x_odd.dtype
    assert jnp.allclose(out_odd, ref_odd, atol=1e-6), "mismatch vs reference (padded)"

    print("KERNEL_OK")
</pallas_src>

<mosaic_0001>
module attributes {stable_mosaic.version = 11 : i64} {
  func.func @_peak_constraint_kernel(%arg0: i32, %arg1: memref<8x1024xf32, #tpu.memory_space<vmem>>, %arg2: memref<1xf32, #tpu.memory_space<smem>>, %arg3: memref<8x1024xf32, #tpu.memory_space<vmem>>) attributes {dimension_semantics = [#tpu.dimension_semantics<parallel>], iteration_bounds = array<i64: 1>, scalar_prefetch = 0 : i64, scratch_operands = 0 : i64, tpu.core_type = #tpu.core_type<tc>, window_params = [{transform_indices = @transform_0, window_bounds = array<i64: 8, 1024>}, {transform_indices = @transform_1, window_bounds = array<i64: 1>}, {transform_indices = @transform_2, window_bounds = array<i64: 8, 1024>}]} {
    %c0 = arith.constant 0 : index
    %c0_0 = arith.constant 0 : index
    %0 = vector.load %arg1[%c0, %c0_0] : memref<8x1024xf32, #tpu.memory_space<vmem>>, vector<8x1024xf32>
    %c0_1 = arith.constant 0 : index
    %1 = memref.load %arg2[%c0_1] : memref<1xf32, #tpu.memory_space<smem>>
    %cst = arith.constant 0.000000e+00 : f32
    %2 = arith.subf %cst, %1 : f32
    %3 = vector.broadcast %2 : f32 to vector<8x1024xf32>
    %4 = arith.cmpf ogt, %0, %3 : vector<8x1024xf32>
    %5 = vector.broadcast %2 : f32 to vector<8x1024xf32>
    %6 = arith.select %4, %0, %5 : vector<8x1024xi1>, vector<8x1024xf32>
    %7 = vector.broadcast %1 : f32 to vector<8x1024xf32>
    %8 = arith.cmpf olt, %6, %7 : vector<8x1024xf32>
    %9 = vector.broadcast %1 : f32 to vector<8x1024xf32>
    %10 = arith.select %8, %6, %9 : vector<8x1024xi1>, vector<8x1024xf32>
    %c0_2 = arith.constant 0 : index
    %c0_3 = arith.constant 0 : index
    %11 = vector.load %arg3[%c0_2, %c0_3] : memref<8x1024xf32, #tpu.memory_space<vmem>>, vector<8x1024xf32>
    tpu.vector_store %arg3[%c0_2, %c0_3], %10 {strides = array<i32>} : memref<8x1024xf32, #tpu.memory_space<vmem>>, vector<8x1024xf32>,
    return
  }
  func.func @transform_0(%arg0: i32) -> (i32, i32) {
    %c0_i32 = arith.constant 0 : i32
    %c0_i32_0 = arith.constant 0 : i32
    return %arg0, %c0_i32 : i32, i32
  }
  func.func @transform_1(%arg0: i32) -> i32 {
    %c0_i32 = arith.constant 0 : i32
    %c0_i32_0 = arith.constant 0 : i32
    return %c0_i32 : i32
  }
  func.func @transform_2(%arg0: i32) -> (i32, i32) {
    %c0_i32 = arith.constant 0 : i32
    %c0_i32_0 = arith.constant 0 : i32
    return %arg0, %c0_i32 : i32, i32
  }
}

</mosaic_0001>

<llo_original>
// kernel: tpu_custom_call.1
$region0: #{tpu_custom_call.1}
  #allocation0 [shape = 'u32[]', space=smem, size = 0x4, offset = 0x4, fixed_abs, tag = 'smem constant byte address 0x4 - core index']
  #allocation1 [shape = 'u32[144,128]{1,0:T(1,128)}', space=vmem, size = 0x12000, scoped, tag = 'internal scratch']
  #allocation2 [shape = 'f32[1]{0:T(128)S(6)}', space=smem, size = 0x200, scoped, tag = 'scoped memory for tpu_custom_call.1']
  %s0 = inlined_call_operand.hbm [shape: f32[8,1024], index: 0, kind: input, shape index: {}, may-alias: {0,2}]
  %s1 = inlined_call_operand.<no memory space> [shape: f32[1], index: 1, kind: input, shape index: {}]
  %s2 = inlined_call_operand.hbm [shape: f32[8,1024], index: 2, kind: output, shape index: {}, may-alias: {0,2}]
  %s3 = sld [smem:[#allocation0]]
  $region22: #{tpu_custom_call.1} parent=0
    _
  %s5 = ssub.s32 1, %s3
  %s6 = scalar_select 0, %s5, %s3
  %7 = sst [smem:[#allocation2]] %s1
  $region1: #{tpu_custom_call.1} parent=0
    #allocation3 [shape = 'u8[32768]{0}', space=vmem, size = 0x8000, scoped, tag = 'input window, operand 0, single buffered']
    #allocation4 [shape = 's32[1]{0}', space=sflag, size = 0x4, scoped, tag = 'scoped memory for tpu_custom_call.1']
    #allocation5 [shape = 's32[1]{0}', space=sflag, size = 0x4, scoped, tag = 'scoped memory for tpu_custom_call.1']
    #allocation6 [shape = 'u8[32768]{0}', space=vmem, size = 0x8000, scoped, tag = 'output window, operand 0, single buffered']
    %8 = vsyncpa [#allocation4], 0
    %9 = vsyncpa [#allocation5], 0
    // Predicated region
    $region2: #{tpu_custom_call.1} parent=1 // pred_check
      _
    $region3: #{tpu_custom_call.1} parent=1 // pred_check_branch
      %11 = sbr.rel (0) target = $region5
    $region4: #{tpu_custom_call.1} parent=1 // pred_region
      %s13 = ssub.s32 1024, 1024
      %14 = vsyncadd [#allocation4], %s13
      %s16 = sshll.u32 [#allocation3], 4
      %s17 = int_to_ptr.vmem [resolvable:$true] %s16
      %19 = dma.hbm_to_vmem [thread:$0]  %s0, 1024, %s17, [#allocation4]
    $region5: #{tpu_custom_call.1} parent=1 // pred_fallthru
      _
    // Predicated region
    $region6: #{tpu_custom_call.1} parent=1 // pred_check
      _
    $region7: #{tpu_custom_call.1} parent=1 // pred_check_branch
      %21 = sbr.rel (0) target = $region9
    $region8: #{tpu_custom_call.1} parent=1 // pred_region
      _
    $region9: #{tpu_custom_call.1} parent=1 // pred_fallthru
      _
    // Predicated region
    $region10: #{tpu_custom_call.1} parent=1 // pred_check
      _
    $region11: #{tpu_custom_call.1} parent=1 // pred_check_branch
      %23 = sbr.rel (0) target = $region13
    $region12: #{tpu_custom_call.1} parent=1 // pred_region
      %24 = dma.done [#allocation4], 1024
    $region13: #{tpu_custom_call.1} parent=1 // pred_fallthru
      _
    %v25 = vld [vmem:[#allocation3] sm:$0xff]
    %v26 = vld [vmem:[#allocation3 + $0x8] sm:$0xff]
    %v27 = vld [vmem:[#allocation3 + $0x10] sm:$0xff]
    %v28 = vld [vmem:[#allocation3 + $0x18] sm:$0xff]
    %v29 = vld [vmem:[#allocation3 + $0x20] sm:$0xff]
    %v30 = vld [vmem:[#allocation3 + $0x28] sm:$0xff]
    %v31 = vld [vmem:[#allocation3 + $0x30] sm:$0xff]
    %v32 = vld [vmem:[#allocation3 + $0x38] sm:$0xff]
    %s33 = sld [smem:[#allocation2]]
    %s34 = ssub.f32 0.0, %s33
    %v35 = vstv %s34
    %vm36 = vcmp.gt.f32.partialorder %v25, %v35
    %vm37 = vcmp.gt.f32.partialorder %v26, %v35
    %vm38 = vcmp.gt.f32.partialorder %v27, %v35
    %vm39 = vcmp.gt.f32.partialorder %v28, %v35
    %vm40 = vcmp.gt.f32.partialorder %v29, %v35
    %vm41 = vcmp.gt.f32.partialorder %v30, %v35
    %vm42 = vcmp.gt.f32.partialorder %v31, %v35
    %vm43 = vcmp.gt.f32.partialorder %v32, %v35
    %v44 = vsel %vm36, %v25, %v35
    %v45 = vsel %vm37, %v26, %v35
    %v46 = vsel %vm38, %v27, %v35
    %v47 = vsel %vm39, %v28, %v35
    %v48 = vsel %vm40, %v29, %v35
    %v49 = vsel %vm41, %v30, %v35
    %v50 = vsel %vm42, %v31, %v35
    %v51 = vsel %vm43, %v32, %v35
    %v52 = vstv %s33
    %vm53 = vcmp.lt.f32.partialorder %v44, %v52
    %vm54 = vcmp.lt.f32.partialorder %v45, %v52
    %vm55 = vcmp.lt.f32.partialorder %v46, %v52
    %vm56 = vcmp.lt.f32.partialorder %v47, %v52
    %vm57 = vcmp.lt.f32.partialorder %v48, %v52
    %vm58 = vcmp.lt.f32.partialorder %v49, %v52
    %vm59 = vcmp.lt.f32.partialorder %v50, %v52
    %vm60 = vcmp.lt.f32.partialorder %v51, %v52
    %v61 = vsel %vm53, %v44, %v52
    %v62 = vsel %vm54, %v45, %v52
    %v63 = vsel %vm55, %v46, %v52
    %v64 = vsel %vm56, %v47, %v52
    %v65 = vsel %vm57, %v48, %v52
    %v66 = vsel %vm58, %v49, %v52
    %v67 = vsel %vm59, %v50, %v52
    %v68 = vsel %vm60, %v51, %v52
    %69 = vst [vmem:[#allocation6] sm:$0xff] %v61
    %70 = vst [vmem:[#allocation6 + $0x8] sm:$0xff] %v62
    %71 = vst [vmem:[#allocation6 + $0x10] sm:$0xff] %v63
    %72 = vst [vmem:[#allocation6 + $0x18] sm:$0xff] %v64
    %73 = vst [vmem:[#allocation6 + $0x20] sm:$0xff] %v65
    %74 = vst [vmem:[#allocation6 + $0x28] sm:$0xff] %v66
    %75 = vst [vmem:[#allocation6 + $0x30] sm:$0xff] %v67
    %76 = vst [vmem:[#allocation6 + $0x38] sm:$0xff] %v68
    // Predicated region
    $region14: #{tpu_custom_call.1} parent=1 // pred_check
      _
    $region15: #{tpu_custom_call.1} parent=1 // pred_check_branch
      %78 = sbr.rel (0) target = $region17
    $region16: #{tpu_custom_call.1} parent=1 // pred_region
      %s80 = ssub.s32 1024, 1024
      %81 = vsyncadd [#allocation5], %s80
      %s83 = sshll.u32 [#allocation6], 4
      %s84 = int_to_ptr.vmem [resolvable:$true] %s83
      %86 = dma.vmem_to_hbm [thread:$0]  %s84, 1024, %s2, [#allocation5]
    $region17: #{tpu_custom_call.1} parent=1 // pred_fallthru
      _
    // Predicated region
    $region18: #{tpu_custom_call.1} parent=1 // pred_check
      _
    $region19: #{tpu_custom_call.1} parent=1 // pred_check_branch
      %88 = sbr.rel (0) target = $region21
    $region20: #{tpu_custom_call.1} parent=1 // pred_region
      %89 = dma.done [#allocation5], 1024
    $region21: #{tpu_custom_call.1} parent=1 // pred_fallthru
      _
    %90 = vsyncpa [#allocation4], 1
    %91 = vsyncpa [#allocation5], 1

</llo_original>
